<compile_context>
chip_gen: v5e
topology: v5e:2x2
jax: 0.10.0
libtpu: 0.0.40
codegen_flags: <defaults>
</compile_context>

<pallas_src>
import jax
import jax.numpy as jnp
from jax.experimental import pallas as pl
from jax.experimental.pallas import tpu as pltpu

IN_FEATURES = 101
NUM_CLASSES = 2
MAX_TILE_B = 8192    # 8 MiB double-buffered x tile -> safe on v5e/v6e/v7x defaults
MIN_SPLIT_B = 2048   # below this, a single tile; per-step overhead would dominate


def _round_up(x, m):
    return ((x + m - 1) // m) * m


def final_layer_kernel(x_ref, wd_ref, bd_ref, o_ref):
    # x_ref  : (TB, 101) VMEM  batch tile, natural layout (rows on sublanes)
    # wd_ref : (101, 1)  VMEM  weight difference column  W[1]-W[0]
    # bd_ref : (1, 1)    VMEM  bias difference           b[1]-b[0]
    # o_ref  : (TB, 2)   VMEM  softmax probabilities
    x = x_ref[...]
    wd = wd_ref[...]
    bd = bd_ref[...]                                   # (1, 1), broadcasts below

    # Logit difference per row: d = x @ (W[1]-W[0]) + (b[1]-b[0])  -> (TB, 1)
    d = jnp.dot(x, wd, preferred_element_type=jnp.float32) + bd

    # 2-class softmax == sigmoid of the logit difference (numerically stable:
    # an exp overflow just saturates the divide to exactly 0).
    p1 = 1.0 / (1.0 + jnp.exp(-d))
    p0 = 1.0 / (1.0 + jnp.exp(d))

    # Two direct slice stores (no concatenate / extra temporary).
    o_ref[:, 0:1] = p0.astype(o_ref.dtype)
    o_ref[:, 1:2] = p1.astype(o_ref.dtype)


def final_layer(x, weight, bias):
    """x: (B, 101) f32, weight: (2, 101) f32 (PyTorch layout), bias: (2,) f32."""
    B = x.shape[0]

    if B < MIN_SPLIT_B:
        # Whole batch in one tile (block dims == full array dims are always legal).
        TB = B
    else:
        # >= 2 grid steps so both v7x TensorCores get work; tile is a multiple
        # of 128 rows (>= 8 sublanes) and capped at 8192 for v5e's VMEM budget.
        TB = min(MAX_TILE_B, _round_up(pl.cdiv(B, 2), 128))
    grid = (pl.cdiv(B, TB),)

    # Collapse the 2-class head to a single difference column / scalar.
    w_diff = (weight[1] - weight[0]).reshape(IN_FEATURES, 1)   # (101, 1)
    b_diff = (bias[1] - bias[0]).reshape(1, 1)                 # (1, 1)

    out = pl.pallas_call(
        final_layer_kernel,
        out_shape=jax.ShapeDtypeStruct((B, NUM_CLASSES), jnp.float32),
        grid_spec=pltpu.PrefetchScalarGridSpec(
            num_scalar_prefetch=0,
            grid=grid,
            in_specs=[
                pl.BlockSpec((TB, IN_FEATURES), lambda i: (i, 0)),
                pl.BlockSpec((IN_FEATURES, 1), lambda i: (0, 0)),
                pl.BlockSpec((1, 1), lambda i: (0, 0)),
            ],
            out_specs=pl.BlockSpec((TB, NUM_CLASSES), lambda i: (i, 0)),
        ),
        compiler_params=pltpu.CompilerParams(
            # Batch tiles are independent -> shard across TCs on v7x megacore.
            dimension_semantics=("parallel",),
        ),
    )(x, w_diff, b_diff)

    return out                                                  # (B, 2)


def _reference(x, weight, bias):
    return jax.nn.softmax(x @ weight.T + bias, axis=1)


if __name__ == "__main__":
    key = jax.random.PRNGKey(0)
    kx, kw, kb, kx2, kx3 = jax.random.split(key, 5)

    # nn.Linear(101, 2)-shaped params with a kaiming-uniform-like scale.
    bound = 1.0 / jnp.sqrt(jnp.float32(IN_FEATURES))
    weight = jax.random.uniform(
        kw, (NUM_CLASSES, IN_FEATURES), minval=-bound, maxval=bound,
        dtype=jnp.float32)
    bias = jax.random.uniform(
        kb, (NUM_CLASSES,), minval=-bound, maxval=bound, dtype=jnp.float32)

    # Small batch (single-tile path).
    B = 8
    x = jax.random.normal(kx, (B, IN_FEATURES), dtype=jnp.float32)
    out = jax.block_until_ready(final_layer(x, weight, bias))
    assert out.shape == (B, NUM_CLASSES)
    assert jnp.allclose(out, _reference(x, weight, bias), atol=1e-5, rtol=1e-5), \
        "mismatch vs reference (small batch)"

    # Ragged single-tile batch (B not a multiple of 8).
    B2 = 1037
    x2 = jax.random.normal(kx2, (B2, IN_FEATURES), dtype=jnp.float32)
    out2 = jax.block_until_ready(final_layer(x2, weight, bias))
    assert out2.shape == (B2, NUM_CLASSES)
    assert jnp.allclose(out2, _reference(x2, weight, bias), atol=1e-5, rtol=1e-5), \
        "mismatch vs reference (ragged single tile)"

    # Larger batch exercising the tiled, pipelined path (2 grid steps, ragged
    # last tile).
    B3 = 4100
    x3 = jax.random.normal(kx3, (B3, IN_FEATURES), dtype=jnp.float32)
    out3 = jax.block_until_ready(final_layer(x3, weight, bias))
    assert out3.shape == (B3, NUM_CLASSES)
    assert jnp.allclose(out3, _reference(x3, weight, bias), atol=1e-5, rtol=1e-5), \
        "mismatch vs reference (tiled batch)"

    # TODO(synk): the original module's trailing .cuda() is a device move with
    # no TPU/JAX equivalent; outputs stay on the default (TPU) device.
    print("KERNEL_OK")
</pallas_src>

<mosaic_0001>
module attributes {stable_mosaic.version = 11 : i64} {
  func.func @final_layer_kernel(%arg0: i32, %arg1: memref<8x101xf32, #tpu.memory_space<vmem>>, %arg2: memref<101x1xf32, #tpu.memory_space<vmem>>, %arg3: memref<1x1xf32, #tpu.memory_space<vmem>>, %arg4: memref<8x2xf32, #tpu.memory_space<vmem>>) attributes {dimension_semantics = [#tpu.dimension_semantics<parallel>], iteration_bounds = array<i64: 1>, scalar_prefetch = 0 : i64, scratch_operands = 0 : i64, tpu.core_type = #tpu.core_type<tc>, window_params = [{transform_indices = @transform_0, window_bounds = array<i64: 8, 101>}, {pipeline_mode = #tpu.pipeline_mode<synchronous>, transform_indices = @transform_1, window_bounds = array<i64: 101, 1>}, {pipeline_mode = #tpu.pipeline_mode<synchronous>, transform_indices = @transform_2, window_bounds = array<i64: 1, 1>}, {transform_indices = @transform_3, window_bounds = array<i64: 8, 2>}]} {
    %c0 = arith.constant 0 : index
    %c0_0 = arith.constant 0 : index
    %0 = vector.load %arg1[%c0, %c0_0] : memref<8x101xf32, #tpu.memory_space<vmem>>, vector<8x101xf32>
    %c0_1 = arith.constant 0 : index
    %c0_2 = arith.constant 0 : index
    %1 = vector.load %arg2[%c0_1, %c0_2] : memref<101x1xf32, #tpu.memory_space<vmem>>, vector<101x1xf32>
    %c0_3 = arith.constant 0 : index
    %c0_4 = arith.constant 0 : index
    %2 = vector.load %arg3[%c0_3, %c0_4] : memref<1x1xf32, #tpu.memory_space<vmem>>, vector<1x1xf32>
    %cst = arith.constant dense<0.000000e+00> : vector<8x1xf32>
    %3 = tpu.matmul %0, %1, %cst {dimension_numbers = #tpu.dot_dimension_numbers<[1], [0], [0], [1], [0, 0, 1, 1], [], []>} : vector<8x101xf32>, vector<101x1xf32>, vector<8x1xf32> -> vector<8x1xf32>
    %4 = vector.broadcast %2 : vector<1x1xf32> to vector<8x1xf32>
    %5 = arith.addf %3, %4 : vector<8x1xf32>
    %cst_5 = arith.constant 0.000000e+00 : f32
    %6 = vector.broadcast %cst_5 : f32 to vector<8x1xf32>
    %7 = arith.subf %6, %5 : vector<8x1xf32>
    %8 = math.exp %7 : vector<8x1xf32>
    %cst_6 = arith.constant 1.000000e+00 : f32
    %9 = vector.broadcast %cst_6 : f32 to vector<8x1xf32>
    %10 = arith.addf %9, %8 : vector<8x1xf32>
    %cst_7 = arith.constant 1.000000e+00 : f32
    %11 = vector.broadcast %cst_7 : f32 to vector<8x1xf32>
    %12 = arith.divf %11, %10 : vector<8x1xf32>
    %13 = math.exp %5 : vector<8x1xf32>
    %cst_8 = arith.constant 1.000000e+00 : f32
    %14 = vector.broadcast %cst_8 : f32 to vector<8x1xf32>
    %15 = arith.addf %14, %13 : vector<8x1xf32>
    %cst_9 = arith.constant 1.000000e+00 : f32
    %16 = vector.broadcast %cst_9 : f32 to vector<8x1xf32>
    %17 = arith.divf %16, %15 : vector<8x1xf32>
    %c0_10 = arith.constant 0 : index
    %c0_11 = arith.constant 0 : index
    %18 = vector.load %arg4[%c0_10, %c0_11] : memref<8x2xf32, #tpu.memory_space<vmem>>, vector<8x1xf32>
    tpu.vector_store %arg4[%c0_10, %c0_11], %17 {strides = array<i32>} : memref<8x2xf32, #tpu.memory_space<vmem>>, vector<8x1xf32>,
    %c0_12 = arith.constant 0 : index
    %c1 = arith.constant 1 : index
    %19 = vector.load %arg4[%c0_12, %c1] : memref<8x2xf32, #tpu.memory_space<vmem>>, vector<8x1xf32>
    tpu.vector_store %arg4[%c0_12, %c1], %12 {strides = array<i32>} : memref<8x2xf32, #tpu.memory_space<vmem>>, vector<8x1xf32>,
    return
  }
  func.func @transform_0(%arg0: i32) -> (i32, i32) {
    %c0_i32 = arith.constant 0 : i32
    %c0_i32_0 = arith.constant 0 : i32
    return %arg0, %c0_i32 : i32, i32
  }
  func.func @transform_1(%arg0: i32) -> (i32, i32) {
    %c0_i32 = arith.constant 0 : i32
    %c0_i32_0 = arith.constant 0 : i32
    %c0_i32_1 = arith.constant 0 : i32
    return %c0_i32, %c0_i32_0 : i32, i32
  }
  func.func @transform_2(%arg0: i32) -> (i32, i32) {
    %c0_i32 = arith.constant 0 : i32
    %c0_i32_0 = arith.constant 0 : i32
    %c0_i32_1 = arith.constant 0 : i32
    return %c0_i32, %c0_i32_0 : i32, i32
  }
  func.func @transform_3(%arg0: i32) -> (i32, i32) {
    %c0_i32 = arith.constant 0 : i32
    %c0_i32_0 = arith.constant 0 : i32
    return %arg0, %c0_i32 : i32, i32
  }
}

</mosaic_0001>

<llo_original>
// kernel: tpu_custom_call.1
$region0: #{tpu_custom_call.1}
  #allocation0 [shape = 'u32[]', space=smem, size = 0x4, offset = 0x4, fixed_abs, tag = 'smem constant byte address 0x4 - core index']
  #allocation1 [shape = 'u32[72,128]{1,0:T(1,128)}', space=vmem, size = 0x9000, scoped, tag = 'internal scratch']
  #allocation2 [shape = 'f32[1,1]{1,0:T(1,128)S(1)}', space=vmem, size = 0x200, scoped, tag = 'scoped memory for tpu_custom_call.1']
  %s0 = inlined_call_operand.vmem [shape: f32[8,101], index: 0, kind: input, shape index: {}]
  %s1 = inlined_call_operand.vmem [shape: f32[101,1], index: 1, kind: input, shape index: {}]
  %s2 = inlined_call_operand.<no memory space> [shape: f32[1,1], index: 2, kind: input, shape index: {}]
  %s3 = inlined_call_operand.vmem [shape: f32[8,2], index: 3, kind: output, shape index: {}]
  %s4 = sld [smem:[#allocation0]]
  $region22: #{tpu_custom_call.1} parent=0
    _
  %s6 = ssub.s32 1, %s4
  %s7 = scalar_select 0, %s6, %s4
  %v8 = vstv %s2
  %9 = vst [vmem:[#allocation2] sm:$0x1] %v8
  // Predicated region
  $region2: #{tpu_custom_call.1} parent=0 // pred_check
    _
  $region3: #{tpu_custom_call.1} parent=0 // pred_check_branch
    %11 = sbr.rel (0) target = $region5
  $region4: #{tpu_custom_call.1} parent=0 // pred_region
    _
  $region5: #{tpu_custom_call.1} parent=0 // pred_fallthru
    _
  // Predicated region
  $region6: #{tpu_custom_call.1} parent=0 // pred_check
    _
  $region7: #{tpu_custom_call.1} parent=0 // pred_check_branch
    %13 = sbr.rel (0) target = $region9
  $region8: #{tpu_custom_call.1} parent=0 // pred_region
    _
  $region9: #{tpu_custom_call.1} parent=0 // pred_fallthru
    _
  // Predicated region
  $region10: #{tpu_custom_call.1} parent=0 // pred_check
    _
  $region11: #{tpu_custom_call.1} parent=0 // pred_check_branch
    %15 = sbr.rel (0) target = $region13
  $region12: #{tpu_custom_call.1} parent=0 // pred_region
    _
  $region13: #{tpu_custom_call.1} parent=0 // pred_fallthru
    _
  %v16 = vld [vmem:[%s0] sm:$0xff]
  %v17 = vld [vmem:[%s1] sm:$0xff]
  %v18 = vld [vmem:[%s1 + $0x8] sm:$0xff]
  %v19 = vld [vmem:[%s1 + $0x10] sm:$0xff]
  %v20 = vld [vmem:[%s1 + $0x18] sm:$0xff]
  %v21 = vld [vmem:[%s1 + $0x20] sm:$0xff]
  %v22 = vld [vmem:[%s1 + $0x28] sm:$0xff]
  %v23 = vld [vmem:[%s1 + $0x30] sm:$0xff]
  %v24 = vld [vmem:[%s1 + $0x38] sm:$0xff]
  %v25 = vld [vmem:[%s1 + $0x40] sm:$0xff]
  %v26 = vld [vmem:[%s1 + $0x48] sm:$0xff]
  %v27 = vld [vmem:[%s1 + $0x50] sm:$0xff]
  %v28 = vld [vmem:[%s1 + $0x58] sm:$0xff]
  %v29 = vld [vmem:[%s1 + $0x60] sm:$0x1f]
  %v30 = vld [vmem:[#allocation2] sm:$0x1]
  %v32 = vperm.slane %v30, 0
  %vm34 = vcmask 826368
  %v36 = vsel %vm34, %v16, 0
  %vm38 = vcmask 1044480
  %v40 = vsel %vm38, %v29, 0
  %42 = vmatpush.msra.mxu0 0.0
  %43 = vmatpush.msra.mxu0 0.0
  %44 = vmatpush.msra.mxu0 0.0
  %45 = vmatpush.msra.mxu0 %v40
  %46 = vmatpush.msra.mxu0 %v28
  %47 = vmatpush.msra.mxu0 %v27
  %48 = vmatpush.msra.mxu0 %v26
  %49 = vmatpush.msra.mxu0 %v25
  %50 = vmatpush.msra.mxu0 %v24
  %51 = vmatpush.msra.mxu0 %v23
  %52 = vmatpush.msra.mxu0 %v22
  %53 = vmatpush.msra.mxu0 %v21
  %54 = vmatpush.msra.mxu0 %v20
  %55 = vmatpush.msra.mxu0 %v19
  %56 = vmatpush.msra.mxu0 %v18
  %57 = vmatpush.msra.mxu0 %v17
  %58 = vmatmul.f32.gmra.mxu0 %v36
  %v59 = vpop.f32.mrf.mxu0
  %v60 = vadd.f32 %v32, %v59
  %61 = vdwg.mxu0
  %v62 = vsub.f32 0.0, %v60
  %v63 = vmul.f32 %v62, 1.442695
  %v64 = vpow.pop %v63
  %v65 = vadd.f32 %v64, 1.0
  %v66 = vrcp.pop %v65
  %v67 = vmul.f32 %v65, %v66
  %v68 = vsub.f32 1.0, %v67
  %v69 = vmul.f32 %v66, %v68
  %v70 = vadd.f32 %v66, %v69
  %vm71 = vweird.f32 %v65
  %vm72 = vweird.f32 %v66
  %vm73 = vmor %vm71, %vm72
  %v74 = vsel %vm73, %v66, %v70
  %v75 = vand.u32 2147483647, %v65
  %vm76 = vcmp.eq.f32.partialorder %v75, 8.507059e+37
  %v77 = vand.u32 %v65, 2147483648
  %v78 = vor.u32 1.1754944e-38, %v77
  %v79 = vsel %vm76, %v78, %v74
  %v80 = vmul.f32 1.0, %v79
  %v81 = vmul.f32 %v60, 1.442695
  %v82 = vpow.pop %v81
  %v83 = vadd.f32 %v82, 1.0
  %v84 = vrcp.pop %v83
  %v85 = vmul.f32 %v83, %v84
  %v86 = vsub.f32 1.0, %v85
  %v87 = vmul.f32 %v84, %v86
  %v88 = vadd.f32 %v84, %v87
  %vm89 = vweird.f32 %v83
  %vm90 = vweird.f32 %v84
  %vm91 = vmor %vm89, %vm90
  %v92 = vsel %vm91, %v84, %v88
  %v93 = vand.u32 2147483647, %v83
  %vm94 = vcmp.eq.f32.partialorder %v93, 8.507059e+37
  %v95 = vand.u32 %v83, 2147483648
  %v96 = vor.u32 1.1754944e-38, %v95
  %v97 = vsel %vm94, %v96, %v92
  %v98 = vmul.f32 1.0, %v97
  %vm99 = vcmask 7168
  %100 = vst.msk [vmem:[%s3] sm:$0xff] %vm99, %v98
  %102 = vrot.lane.b32.xlu0 %v80, 1
  %v103 = vpop.permute.xlu0 %102
  %vm105 = vcmask 15368
  %106 = vst.msk [vmem:[%s3] sm:$0xff] %vm105, %v103
  // Predicated region
  $region14: #{tpu_custom_call.1} parent=0 // pred_check
    _
  $region15: #{tpu_custom_call.1} parent=0 // pred_check_branch
    %108 = sbr.rel (0) target = $region17
  $region16: #{tpu_custom_call.1} parent=0 // pred_region
    _
  $region17: #{tpu_custom_call.1} parent=0 // pred_fallthru
    _
  // Predicated region
  $region18: #{tpu_custom_call.1} parent=0 // pred_check
    _
  $region19: #{tpu_custom_call.1} parent=0 // pred_check_branch
    %110 = sbr.rel (0) target = $region21
  $region20: #{tpu_custom_call.1} parent=0 // pred_region
    _
  $region21: #{tpu_custom_call.1} parent=0 // pred_fallthru
    _

</llo_original>
